<compile_context>
chip_gen: v5e
topology: v5e:2x2
jax: 0.10.0
libtpu: 0.0.40
codegen_flags: <defaults>
</compile_context>

<pallas_src>
import functools

import numpy as np
import jax
import jax.numpy as jnp
from jax.experimental import pallas as pl
from jax.experimental.pallas import tpu as pltpu


def _round_up(x, m):
    return (x + m - 1) // m * m


def _mlp_kernel(x_ref, wfc_ref, bfc_ref, wproj_ref, bproj_ref, o_ref):
    # First matmul: (TM, C) @ (C, 4C) -> f32 accumulator; bias added in f32.
    h = jnp.dot(x_ref[...], wfc_ref[...], preferred_element_type=jnp.float32)
    h = h + bfc_ref[...].astype(jnp.float32)

    # tanh-approximate GELU in f32 (matches nn.GELU(approximate='tanh')).
    c = 0.7978845608028654  # sqrt(2/pi)
    h = 0.5 * h * (1.0 + jnp.tanh(c * (h + 0.044715 * (h * h * h))))

    # Cast back to the compute dtype so the second matmul stays on the fast
    # bf16 MXU path; accumulate again in f32 and cast only at the final store.
    h = h.astype(x_ref.dtype)
    acc = jnp.dot(h, wproj_ref[...], preferred_element_type=jnp.float32)
    acc = acc + bproj_ref[...].astype(jnp.float32)

    o_ref[...] = acc.astype(o_ref.dtype)


@functools.partial(jax.jit, static_argnames=("tm",))
def mlp_pallas(x, w_fc, b_fc, w_proj, b_proj, *, tm=256):
    """Fused GPT-2 MLP forward. x: (..., C); w_fc: (C, 4C); w_proj: (4C, C)."""
    orig_shape = x.shape
    C = orig_shape[-1]
    H = w_fc.shape[1]

    x2 = x.reshape(-1, C)
    M = x2.shape[0]

    # Token tile: multiple of 8 (sublane), 256 when there is enough work.
    tm = min(tm, _round_up(M, 8))
    m_pad = _round_up(M, tm)
    if m_pad != M:
        x2 = jnp.pad(x2, ((0, m_pad - M), (0, 0)))

    # Biases as (1, N) slabs so they load as lane-dense VMEM-resident rows.
    b_fc2 = b_fc.reshape(1, H)
    b_proj2 = b_proj.reshape(1, C)

    grid = (m_pad // tm,)
    dtype_bytes = x2.dtype.itemsize

    # Rough VMEM budget: double-buffered x/out tiles + resident weights/biases
    # + the f32 hidden tile. Explicit so we don't depend on the scoped default.
    vmem_need = (2 * tm * C * dtype_bytes                      # x tiles
                 + 2 * tm * C * dtype_bytes                    # out tiles
                 + 2 * (C * H + H * C + H + C) * dtype_bytes   # weights + biases
                 + tm * H * 4)                                 # f32 hidden value
    vmem_limit = int(min(max(int(vmem_need * 1.5), 16 << 20), 100 << 20))

    cost = pl.CostEstimate(
        flops=4 * m_pad * C * H,                 # two matmuls, 2*M*C*4C each
        transcendentals=m_pad * H,               # one tanh per hidden element
        bytes_accessed=(2 * m_pad * C * dtype_bytes            # x + out
                        + (C * H + H * C + H + C) * dtype_bytes),
    )

    out = pl.pallas_call(
        _mlp_kernel,
        out_shape=jax.ShapeDtypeStruct((m_pad, C), x2.dtype),
        grid_spec=pltpu.PrefetchScalarGridSpec(
            num_scalar_prefetch=0,
            grid=grid,
            in_specs=[
                pl.BlockSpec((tm, C), lambda i: (i, 0)),   # x: streamed over M
                pl.BlockSpec((C, H), lambda i: (0, 0)),    # W_fc: VMEM-resident
                pl.BlockSpec((1, H), lambda i: (0, 0)),    # b_fc: VMEM-resident
                pl.BlockSpec((H, C), lambda i: (0, 0)),    # W_proj: VMEM-resident
                pl.BlockSpec((1, C), lambda i: (0, 0)),    # b_proj: VMEM-resident
            ],
            out_specs=pl.BlockSpec((tm, C), lambda i: (i, 0)),  # lane-dense (TM, C)
        ),
        compiler_params=pltpu.CompilerParams(
            dimension_semantics=("parallel",),   # shard M across TCs (v7x megacore)
            vmem_limit_bytes=vmem_limit,
        ),
        cost_estimate=cost,
    )(x2, w_fc, b_fc2, w_proj, b_proj2)

    return out[:M].reshape(orig_shape)


def _ref_mlp(x, w_fc, b_fc, w_proj, b_proj):
    """Pure-JAX f32 reference of the same forward pass."""
    h = x @ w_fc + b_fc
    h = 0.5 * h * (1.0 + jnp.tanh(0.7978845608028654 * (h + 0.044715 * h ** 3)))
    return h @ w_proj + b_proj


if __name__ == "__main__":
    key = jax.random.PRNGKey(0)
    B, T, C = 2, 8, 128          # small GPT-2-like shapes (n_embd = 128)
    H = 4 * C
    kx, kw1, kb1, kw2, kb2 = jax.random.split(key, 5)

    x_f32 = jax.random.normal(kx, (B, T, C), dtype=jnp.float32)
    # Weights stored [in, out] (i.e. nn.Linear weight transposed once at setup).
    w_fc_f32 = 0.02 * jax.random.normal(kw1, (C, H), dtype=jnp.float32)
    b_fc_f32 = 0.02 * jax.random.normal(kb1, (H,), dtype=jnp.float32)
    w_proj_f32 = 0.02 * jax.random.normal(kw2, (H, C), dtype=jnp.float32)
    b_proj_f32 = 0.02 * jax.random.normal(kb2, (C,), dtype=jnp.float32)

    dtype = jnp.bfloat16
    out = mlp_pallas(
        x_f32.astype(dtype),
        w_fc_f32.astype(dtype),
        b_fc_f32.astype(dtype),
        w_proj_f32.astype(dtype),
        b_proj_f32.astype(dtype),
    )
    out = jax.block_until_ready(out)

    ref = _ref_mlp(x_f32, w_fc_f32, b_fc_f32, w_proj_f32, b_proj_f32)
    err = float(np.max(np.abs(np.asarray(out, dtype=np.float32) - np.asarray(ref))))
    assert err < 5e-2, f"max abs error too large: {err}"
    print("KERNEL_OK")
</pallas_src>

<mosaic_0001>
module attributes {stable_mosaic.version = 11 : i64} {
  func.func @_mlp_kernel(%arg0: i32, %arg1: memref<16x128xbf16, #tpu.memory_space<vmem>>, %arg2: memref<128x512xbf16, #tpu.memory_space<vmem>>, %arg3: memref<1x512xbf16, #tpu.memory_space<vmem>>, %arg4: memref<512x128xbf16, #tpu.memory_space<vmem>>, %arg5: memref<1x128xbf16, #tpu.memory_space<vmem>>, %arg6: memref<16x128xbf16, #tpu.memory_space<vmem>>) attributes {dimension_semantics = [#tpu.dimension_semantics<parallel>], iteration_bounds = array<i64: 1>, scalar_prefetch = 0 : i64, scratch_operands = 0 : i64, tpu.core_type = #tpu.core_type<tc>, window_params = [{transform_indices = @transform_0, window_bounds = array<i64: 16, 128>}, {pipeline_mode = #tpu.pipeline_mode<synchronous>, transform_indices = @transform_1, window_bounds = array<i64: 128, 512>}, {pipeline_mode = #tpu.pipeline_mode<synchronous>, transform_indices = @transform_2, window_bounds = array<i64: 1, 512>}, {pipeline_mode = #tpu.pipeline_mode<synchronous>, transform_indices = @transform_3, window_bounds = array<i64: 512, 128>}, {pipeline_mode = #tpu.pipeline_mode<synchronous>, transform_indices = @transform_4, window_bounds = array<i64: 1, 128>}, {transform_indices = @transform_5, window_bounds = array<i64: 16, 128>}]} {
    %c0 = arith.constant 0 : index
    %c0_0 = arith.constant 0 : index
    %0 = vector.load %arg1[%c0, %c0_0] : memref<16x128xbf16, #tpu.memory_space<vmem>>, vector<16x128xbf16>
    %c0_1 = arith.constant 0 : index
    %c0_2 = arith.constant 0 : index
    %1 = vector.load %arg2[%c0_1, %c0_2] : memref<128x512xbf16, #tpu.memory_space<vmem>>, vector<128x512xbf16>
    %cst = arith.constant dense<0.000000e+00> : vector<16x512xf32>
    %2 = tpu.matmul %0, %1, %cst {dimension_numbers = #tpu.dot_dimension_numbers<[1], [0], [0], [1], [0, 0, 1, 1], [], []>} : vector<16x128xbf16>, vector<128x512xbf16>, vector<16x512xf32> -> vector<16x512xf32>
    %c0_3 = arith.constant 0 : index
    %c0_4 = arith.constant 0 : index
    %3 = vector.load %arg3[%c0_3, %c0_4] : memref<1x512xbf16, #tpu.memory_space<vmem>>, vector<1x512xbf16>
    %4 = arith.extf %3 : vector<1x512xbf16> to vector<1x512xf32>
    %5 = vector.broadcast %4 : vector<1x512xf32> to vector<16x512xf32>
    %6 = arith.addf %2, %5 : vector<16x512xf32>
    %cst_5 = arith.constant 5.000000e-01 : f32
    %7 = vector.broadcast %cst_5 : f32 to vector<16x512xf32>
    %8 = arith.mulf %7, %6 : vector<16x512xf32>
    %9 = arith.mulf %6, %6 : vector<16x512xf32>
    %10 = arith.mulf %9, %6 : vector<16x512xf32>
    %cst_6 = arith.constant 4.471500e-02 : f32
    %11 = vector.broadcast %cst_6 : f32 to vector<16x512xf32>
    %12 = arith.mulf %11, %10 : vector<16x512xf32>
    %13 = arith.addf %6, %12 : vector<16x512xf32>
    %cst_7 = arith.constant 0.797884583 : f32
    %14 = vector.broadcast %cst_7 : f32 to vector<16x512xf32>
    %15 = arith.mulf %14, %13 : vector<16x512xf32>
    %16 = math.tanh %15 : vector<16x512xf32>
    %cst_8 = arith.constant 1.000000e+00 : f32
    %17 = vector.broadcast %cst_8 : f32 to vector<16x512xf32>
    %18 = arith.addf %17, %16 : vector<16x512xf32>
    %19 = arith.mulf %8, %18 : vector<16x512xf32>
    %20 = arith.truncf %19 : vector<16x512xf32> to vector<16x512xbf16>
    %c0_9 = arith.constant 0 : index
    %c0_10 = arith.constant 0 : index
    %21 = vector.load %arg4[%c0_9, %c0_10] : memref<512x128xbf16, #tpu.memory_space<vmem>>, vector<512x128xbf16>
    %cst_11 = arith.constant dense<0.000000e+00> : vector<16x128xf32>
    %22 = tpu.matmul %20, %21, %cst_11 {dimension_numbers = #tpu.dot_dimension_numbers<[1], [0], [0], [1], [0, 0, 1, 1], [], []>} : vector<16x512xbf16>, vector<512x128xbf16>, vector<16x128xf32> -> vector<16x128xf32>
    %c0_12 = arith.constant 0 : index
    %c0_13 = arith.constant 0 : index
    %23 = vector.load %arg5[%c0_12, %c0_13] : memref<1x128xbf16, #tpu.memory_space<vmem>>, vector<1x128xbf16>
    %24 = arith.extf %23 : vector<1x128xbf16> to vector<1x128xf32>
    %25 = vector.broadcast %24 : vector<1x128xf32> to vector<16x128xf32>
    %26 = arith.addf %22, %25 : vector<16x128xf32>
    %27 = arith.truncf %26 : vector<16x128xf32> to vector<16x128xbf16>
    %c0_14 = arith.constant 0 : index
    %c0_15 = arith.constant 0 : index
    %28 = vector.load %arg6[%c0_14, %c0_15] : memref<16x128xbf16, #tpu.memory_space<vmem>>, vector<16x128xbf16>
    tpu.vector_store %arg6[%c0_14, %c0_15], %27 {strides = array<i32>} : memref<16x128xbf16, #tpu.memory_space<vmem>>, vector<16x128xbf16>,
    return
  }
  func.func @transform_0(%arg0: i32) -> (i32, i32) {
    %c0_i32 = arith.constant 0 : i32
    %c0_i32_0 = arith.constant 0 : i32
    return %arg0, %c0_i32 : i32, i32
  }
  func.func @transform_1(%arg0: i32) -> (i32, i32) {
    %c0_i32 = arith.constant 0 : i32
    %c0_i32_0 = arith.constant 0 : i32
    %c0_i32_1 = arith.constant 0 : i32
    return %c0_i32, %c0_i32_0 : i32, i32
  }
  func.func @transform_2(%arg0: i32) -> (i32, i32) {
    %c0_i32 = arith.constant 0 : i32
    %c0_i32_0 = arith.constant 0 : i32
    %c0_i32_1 = arith.constant 0 : i32
    return %c0_i32, %c0_i32_0 : i32, i32
  }
  func.func @transform_3(%arg0: i32) -> (i32, i32) {
    %c0_i32 = arith.constant 0 : i32
    %c0_i32_0 = arith.constant 0 : i32
    %c0_i32_1 = arith.constant 0 : i32
    return %c0_i32, %c0_i32_0 : i32, i32
  }
  func.func @transform_4(%arg0: i32) -> (i32, i32) {
    %c0_i32 = arith.constant 0 : i32
    %c0_i32_0 = arith.constant 0 : i32
    %c0_i32_1 = arith.constant 0 : i32
    return %c0_i32, %c0_i32_0 : i32, i32
  }
  func.func @transform_5(%arg0: i32) -> (i32, i32) {
    %c0_i32 = arith.constant 0 : i32
    %c0_i32_0 = arith.constant 0 : i32
    return %arg0, %c0_i32 : i32, i32
  }
}

</mosaic_0001>

<llo_original>
// kernel: mlp_pallas.1
$region0: #{mlp_pallas.1}
  #allocation0 [shape = 'u32[]', space=smem, size = 0x4, offset = 0x4, fixed_abs, tag = 'smem constant byte address 0x4 - core index']
  #allocation1 [shape = 'u32[72,128]{1,0:T(1,128)}', space=vmem, size = 0x9000, scoped, tag = 'internal scratch']
  %s0 = inlined_call_operand.hbm [shape: bf16[16,128], index: 0, kind: input, shape index: {}]
  %s1 = inlined_call_operand.hbm [shape: bf16[128,512], index: 1, kind: input, shape index: {}]
  %s2 = inlined_call_operand.vmem [shape: bf16[1,512], index: 2, kind: input, shape index: {}]
  %s3 = inlined_call_operand.hbm [shape: bf16[512,128], index: 3, kind: input, shape index: {}]
  %s4 = inlined_call_operand.vmem [shape: bf16[1,128], index: 4, kind: input, shape index: {}]
  %s5 = inlined_call_operand.hbm [shape: bf16[16,128], index: 5, kind: output, shape index: {}]
  %s6 = sld [smem:[#allocation0]]
  $region42: #{mlp_pallas.1} parent=0
    _
  %s8 = ssub.s32 1, %s6
  %s9 = scalar_select 0, %s8, %s6
  $region1: #{mlp_pallas.1} parent=0
    #allocation2 [shape = 'u8[4096]{0}', space=vmem, size = 0x1000, scoped, tag = 'input window, operand 0, single buffered']
    #allocation3 [shape = 's32[1]{0}', space=sflag, size = 0x4, scoped, tag = 'scoped memory for mlp_pallas.1']
    #allocation4 [shape = 's32[1]{0}', space=sflag, size = 0x4, scoped, tag = 'scoped memory for mlp_pallas.1']
    #allocation5 [shape = 'u8[131072]{0}', space=vmem, size = 0x20000, scoped, tag = 'input window, operand 1, single buffered']
    #allocation6 [shape = 's32[1]{0}', space=sflag, size = 0x4, scoped, tag = 'scoped memory for mlp_pallas.1']
    #allocation7 [shape = 'u8[131072]{0}', space=vmem, size = 0x20000, scoped, tag = 'input window, operand 3, single buffered']
    #allocation8 [shape = 'u8[4096]{0}', space=vmem, size = 0x1000, scoped, tag = 'output window, operand 0, single buffered']
    %10 = vsyncpa [#allocation3], 0
    %11 = vsyncpa [#allocation6], 0
    %12 = vsyncpa [#allocation4], 0
    // Predicated region
    $region2: #{mlp_pallas.1} parent=1 // pred_check
      _
    $region3: #{mlp_pallas.1} parent=1 // pred_check_branch
      %14 = sbr.rel (0) target = $region5
    $region4: #{mlp_pallas.1} parent=1 // pred_region
      %16 = vsyncadd [#allocation3], 0
      %s17 = sshll.u32 %s0, 4
      %s18 = int_to_ptr.hbm [resolvable:$true] %s17
      %s19 = sshll.u32 [#allocation2], 4
      %s20 = int_to_ptr.vmem [resolvable:$true] %s19
      %25 = dma.hbm_to_vmem [thread:$0]  %s18, 128, %s20, [#allocation3], 64, 64, 4
    $region5: #{mlp_pallas.1} parent=1 // pred_fallthru
      _
    // Predicated region
    $region6: #{mlp_pallas.1} parent=1 // pred_check
      _
    $region7: #{mlp_pallas.1} parent=1 // pred_check_branch
      %27 = sbr.rel (0) target = $region9
    $region8: #{mlp_pallas.1} parent=1 // pred_region
      %29 = vsyncadd [#allocation6], 0
      %s30 = sshll.u32 %s1, 4
      %s31 = int_to_ptr.hbm [resolvable:$true] %s30
      %s32 = sshll.u32 [#allocation5], 4
      %s33 = int_to_ptr.vmem [resolvable:$true] %s32
      %38 = dma.hbm_to_vmem [thread:$0]  %s31, 4096, %s33, [#allocation6], 256, 256, 16
    $region9: #{mlp_pallas.1} parent=1 // pred_fallthru
      _
    // Predicated region
    $region10: #{mlp_pallas.1} parent=1 // pred_check
      _
    $region11: #{mlp_pallas.1} parent=1 // pred_check_branch
      %40 = sbr.rel (0) target = $region13
    $region12: #{mlp_pallas.1} parent=1 // pred_region
      _
    $region13: #{mlp_pallas.1} parent=1 // pred_fallthru
      _
    // Predicated region
    $region14: #{mlp_pallas.1} parent=1 // pred_check
      _
    $region15: #{mlp_pallas.1} parent=1 // pred_check_branch
      %42 = sbr.rel (0) target = $region17
    $region16: #{mlp_pallas.1} parent=1 // pred_region
      %44 = vsyncadd [#allocation6], 0
      %s45 = sshll.u32 %s3, 4
      %s46 = int_to_ptr.hbm [resolvable:$true] %s45
      %s47 = sshll.u32 [#allocation7], 4
      %s48 = int_to_ptr.vmem [resolvable:$true] %s47
      %53 = dma.hbm_to_vmem [thread:$0]  %s46, 4096, %s48, [#allocation6], 64, 64, 4
    $region17: #{mlp_pallas.1} parent=1 // pred_fallthru
      _
    // Predicated region
    $region18: #{mlp_pallas.1} parent=1 // pred_check
      _
    $region19: #{mlp_pallas.1} parent=1 // pred_check_branch
      %55 = sbr.rel (0) target = $region21
    $region20: #{mlp_pallas.1} parent=1 // pred_region
      _
    $region21: #{mlp_pallas.1} parent=1 // pred_fallthru
      _
    // Predicated region
    $region22: #{mlp_pallas.1} parent=1 // pred_check
      _
    $region23: #{mlp_pallas.1} parent=1 // pred_check_branch
      %57 = sbr.rel (0) target = $region25
    $region24: #{mlp_pallas.1} parent=1 // pred_region
      %59 = dma.done [#allocation3], 128
    $region25: #{mlp_pallas.1} parent=1 // pred_fallthru
      _
    // Predicated region
    $region26: #{mlp_pallas.1} parent=1 // pred_check
      _
    $region27: #{mlp_pallas.1} parent=1 // pred_check_branch
      %61 = sbr.rel (0) target = $region29
    $region28: #{mlp_pallas.1} parent=1 // pred_region
      %63 = dma.done [#allocation6], 4096
    $region29: #{mlp_pallas.1} parent=1 // pred_fallthru
      _
    // Predicated region
    $region30: #{mlp_pallas.1} parent=1 // pred_check
      _
    $region31: #{mlp_pallas.1} parent=1 // pred_check_branch
      %65 = sbr.rel (0) target = $region33
    $region32: #{mlp_pallas.1} parent=1 // pred_region
      %67 = dma.done [#allocation6], 4096
    $region33: #{mlp_pallas.1} parent=1 // pred_fallthru
      _
    %v68 = vld [vmem:[#allocation2] sm:$0xf]
    %v69 = vld [vmem:[#allocation2 + $0x4] sm:$0xf]
    %v70 = vld [vmem:[#allocation5] sm:$0xff]
    %v71 = vld [vmem:[#allocation5 + $0x8] sm:$0xff]
    %v72 = vld [vmem:[#allocation5 + $0x10] sm:$0xff]
    %v73 = vld [vmem:[#allocation5 + $0x18] sm:$0xff]
    %v74 = vld [vmem:[#allocation5 + $0x20] sm:$0xff]
    %v75 = vld [vmem:[#allocation5 + $0x28] sm:$0xff]
    %v76 = vld [vmem:[#allocation5 + $0x30] sm:$0xff]
    %v77 = vld [vmem:[#allocation5 + $0x38] sm:$0xff]
    %v78 = vld [vmem:[#allocation5 + $0x40] sm:$0xff]
    %v79 = vld [vmem:[#allocation5 + $0x48] sm:$0xff]
    %v80 = vld [vmem:[#allocation5 + $0x50] sm:$0xff]
    %v81 = vld [vmem:[#allocation5 + $0x58] sm:$0xff]
    %v82 = vld [vmem:[#allocation5 + $0x60] sm:$0xff]
    %v83 = vld [vmem:[#allocation5 + $0x68] sm:$0xff]
    %v84 = vld [vmem:[#allocation5 + $0x70] sm:$0xff]
    %v85 = vld [vmem:[#allocation5 + $0x78] sm:$0xff]
    %v86 = vld [vmem:[#allocation5 + $0x80] sm:$0xff]
    %v87 = vld [vmem:[#allocation5 + $0x88] sm:$0xff]
    %v88 = vld [vmem:[#allocation5 + $0x90] sm:$0xff]
    %v89 = vld [vmem:[#allocation5 + $0x98] sm:$0xff]
    %v90 = vld [vmem:[#allocation5 + $0xa0] sm:$0xff]
    %v91 = vld [vmem:[#allocation5 + $0xa8] sm:$0xff]
    %v92 = vld [vmem:[#allocation5 + $0xb0] sm:$0xff]
    %v93 = vld [vmem:[#allocation5 + $0xb8] sm:$0xff]
    %v94 = vld [vmem:[#allocation5 + $0xc0] sm:$0xff]
    %v95 = vld [vmem:[#allocation5 + $0xc8] sm:$0xff]
    %v96 = vld [vmem:[#allocation5 + $0xd0] sm:$0xff]
    %v97 = vld [vmem:[#allocation5 + $0xd8] sm:$0xff]
    %v98 = vld [vmem:[#allocation5 + $0xe0] sm:$0xff]
    %v99 = vld [vmem:[#allocation5 + $0xe8] sm:$0xff]
    %v100 = vld [vmem:[#allocation5 + $0xf0] sm:$0xff]
    %v101 = vld [vmem:[#allocation5 + $0xf8] sm:$0xff]
    %v102 = vld [vmem:[%s2] sm:$0xf]
    %v103 = vunpack.c.l.bf16 %v102
    %v105 = vperm.slane %v103, 0
    %v106 = vperm.slane %v103, 2
    %v107 = vperm.slane %v103, 4
    %v108 = vperm.slane %v103, 6
    %v113 = vperm.slane %v105, 0
    %v114 = vperm.slane %v106, 0
    %v115 = vperm.slane %v107, 0
    %v116 = vperm.slane %v108, 0
    %v119 = vunpack.c.l.b16 %v68
    %v120 = vunpack.c.l.b16 %v69
    %v121 = vpack.c.b16 %v120, %v119
    %v155 = vunpack.c.l.b16 %v70
    %v156 = vunpack.c.h.b16 %v70
    %v157 = vunpack.c.l.b16 %v71
    %v158 = vunpack.c.h.b16 %v71
    %v159 = vunpack.c.l.b16 %v72
    %v160 = vunpack.c.h.b16 %v72
    %v161 = vunpack.c.l.b16 %v73
    %v162 = vunpack.c.h.b16 %v73
    %v163 = vunpack.c.l.b16 %v74
    %v164 = vunpack.c.h.b16 %v74
    %v165 = vunpack.c.l.b16 %v75
    %v166 = vunpack.c.h.b16 %v75
    %v167 = vunpack.c.l.b16 %v76
    %v168 = vunpack.c.h.b16 %v76
    %v169 = vunpack.c.l.b16 %v77
    %v170 = vunpack.c.h.b16 %v77
    %v171 = vunpack.c.l.b16 %v78
    %v172 = vunpack.c.h.b16 %v78
    %v173 = vunpack.c.l.b16 %v79
    %v174 = vunpack.c.h.b16 %v79
    %v175 = vunpack.c.l.b16 %v80
    %v176 = vunpack.c.h.b16 %v80
    %v177 = vunpack.c.l.b16 %v81
    %v178 = vunpack.c.h.b16 %v81
    %v179 = vunpack.c.l.b16 %v82
    %v180 = vunpack.c.h.b16 %v82
    %v181 = vunpack.c.l.b16 %v83
    %v182 = vunpack.c.h.b16 %v83
    %v183 = vunpack.c.l.b16 %v84
    %v184 = vunpack.c.h.b16 %v84
    %v185 = vunpack.c.l.b16 %v85
    %v186 = vunpack.c.h.b16 %v85
    %v187 = vunpack.c.l.b16 %v86
    %v188 = vunpack.c.h.b16 %v86
    %v189 = vunpack.c.l.b16 %v87
    %v190 = vunpack.c.h.b16 %v87
    %v191 = vunpack.c.l.b16 %v88
    %v192 = vunpack.c.h.b16 %v88
    %v193 = vunpack.c.l.b16 %v89
    %v194 = vunpack.c.h.b16 %v89
    %v195 = vunpack.c.l.b16 %v90
    %v196 = vunpack.c.h.b16 %v90
    %v197 = vunpack.c.l.b16 %v91
    %v198 = vunpack.c.h.b16 %v91
    %v199 = vunpack.c.l.b16 %v92
    %v200 = vunpack.c.h.b16 %v92
    %v201 = vunpack.c.l.b16 %v93
    %v202 = vunpack.c.h.b16 %v93
    %v203 = vunpack.c.l.b16 %v94
    %v204 = vunpack.c.h.b16 %v94
    %v205 = vunpack.c.l.b16 %v95
    %v206 = vunpack.c.h.b16 %v95
    %v207 = vunpack.c.l.b16 %v96
    %v208 = vunpack.c.h.b16 %v96
    %v209 = vunpack.c.l.b16 %v97
    %v210 = vunpack.c.h.b16 %v97
    %v211 = vunpack.c.l.b16 %v98
    %v212 = vunpack.c.h.b16 %v98
    %v213 = vunpack.c.l.b16 %v99
    %v214 = vunpack.c.h.b16 %v99
    %v215 = vunpack.c.l.b16 %v100
    %v216 = vunpack.c.h.b16 %v100
    %v217 = vunpack.c.l.b16 %v101
    %v218 = vunpack.c.h.b16 %v101
    %v219 = vpack.c.b16 %v159, %v155
    %v220 = vpack.c.b16 %v160, %v156
    %v221 = vpack.c.b16 %v161, %v157
    %v222 = vpack.c.b16 %v162, %v158
    %v223 = vpack.c.b16 %v167, %v163
    %v224 = vpack.c.b16 %v168, %v164
    %v225 = vpack.c.b16 %v169, %v165
    %v226 = vpack.c.b16 %v170, %v166
    %v227 = vpack.c.b16 %v175, %v171
    %v228 = vpack.c.b16 %v176, %v172
    %v229 = vpack.c.b16 %v177, %v173
    %v230 = vpack.c.b16 %v178, %v174
    %v231 = vpack.c.b16 %v183, %v179
    %v232 = vpack.c.b16 %v184, %v180
    %v233 = vpack.c.b16 %v185, %v181
    %v234 = vpack.c.b16 %v186, %v182
    %v235 = vpack.c.b16 %v191, %v187
    %v236 = vpack.c.b16 %v192, %v188
    %v237 = vpack.c.b16 %v193, %v189
    %v238 = vpack.c.b16 %v194, %v190
    %v239 = vpack.c.b16 %v199, %v195
    %v240 = vpack.c.b16 %v200, %v196
    %v241 = vpack.c.b16 %v201, %v197
    %v242 = vpack.c.b16 %v202, %v198
    %v243 = vpack.c.b16 %v207, %v203
    %v244 = vpack.c.b16 %v208, %v204
    %v245 = vpack.c.b16 %v209, %v205
    %v246 = vpack.c.b16 %v210, %v206
    %v247 = vpack.c.b16 %v215, %v211
    %v248 = vpack.c.b16 %v216, %v212
    %v249 = vpack.c.b16 %v217, %v213
    %v250 = vpack.c.b16 %v218, %v214
    %283 = vmatpush.bf16.msra.mxu0 %v247
    %284 = vmatpush.bf16.msra.mxu0 %v243
    %285 = vmatpush.bf16.msra.mxu0 %v239
    %286 = vmatpush.bf16.msra.mxu0 %v235
    %287 = vmatpush.bf16.msra.mxu0 %v231
    %288 = vmatpush.bf16.msra.mxu0 %v227
    %289 = vmatpush.bf16.msra.mxu0 %v223
    %290 = vmatpush.bf16.msra.mxu0 %v219
    %291 = vmatmul.bf16.gmra.mxu0 %v121
    %v292 = vpop.f32.mrf.mxu0
    %v293 = vadd.f32 %v113, %v292
    %v294 = vpop.f32.mrf.mxu0
    %v295 = vadd.f32 %v113, %v294
    %296 = vdwg.mxu0
    %297 = vmatpush.bf16.msra.mxu0 %v248
    %298 = vmatpush.bf16.msra.mxu0 %v244
    %299 = vmatpush.bf16.msra.mxu0 %v240
    %300 = vmatpush.bf16.msra.mxu0 %v236
    %301 = vmatpush.bf16.msra.mxu0 %v232
    %302 = vmatpush.bf16.msra.mxu0 %v228
    %303 = vmatpush.bf16.msra.mxu0 %v224
    %304 = vmatpush.bf16.msra.mxu0 %v220
    %305 = vmatmul.bf16.gmra.mxu0 %v121
    %v306 = vpop.f32.mrf.mxu0
    %v307 = vadd.f32 %v114, %v306
    %v308 = vpop.f32.mrf.mxu0
    %v309 = vadd.f32 %v114, %v308
    %310 = vdwg.mxu0
    %311 = vmatpush.bf16.msra.mxu0 %v249
    %312 = vmatpush.bf16.msra.mxu0 %v245
    %313 = vmatpush.bf16.msra.mxu0 %v241
    %314 = vmatpush.bf16.msra.mxu0 %v237
    %315 = vmatpush.bf16.msra.mxu0 %v233
    %316 = vmatpush.bf16.msra.mxu0 %v229
    %317 = vmatpush.bf16.msra.mxu0 %v225
    %318 = vmatpush.bf16.msra.mxu0 %v221
    %319 = vmatmul.bf16.gmra.mxu0 %v121
    %v320 = vpop.f32.mrf.mxu0
    %v321 = vadd.f32 %v115, %v320
    %v322 = vpop.f32.mrf.mxu0
    %v323 = vadd.f32 %v115, %v322
    %324 = vdwg.mxu0
    %325 = vmatpush.bf16.msra.mxu0 %v250
    %326 = vmatpush.bf16.msra.mxu0 %v246
    %327 = vmatpush.bf16.msra.mxu0 %v242
    %328 = vmatpush.bf16.msra.mxu0 %v238
    %329 = vmatpush.bf16.msra.mxu0 %v234
    %330 = vmatpush.bf16.msra.mxu0 %v230
    %331 = vmatpush.bf16.msra.mxu0 %v226
    %332 = vmatpush.bf16.msra.mxu0 %v222
    %333 = vmatmul.bf16.gmra.mxu0 %v121
    %v334 = vpop.f32.mrf.mxu0
    %v335 = vadd.f32 %v116, %v334
    %v336 = vpop.f32.mrf.mxu0
    %v337 = vadd.f32 %v116, %v336
    %338 = vdwg.mxu0
    %v339 = vmul.f32 %v293, 0.5
    %v340 = vmul.f32 %v307, 0.5
    %v341 = vmul.f32 %v321, 0.5
    %v342 = vmul.f32 %v335, 0.5
    %v343 = vmul.f32 %v295, 0.5
    %v344 = vmul.f32 %v309, 0.5
    %v345 = vmul.f32 %v323, 0.5
    %v346 = vmul.f32 %v337, 0.5
    %v347 = vmul.f32 %v293, %v293
    %v348 = vmul.f32 %v307, %v307
    %v349 = vmul.f32 %v321, %v321
    %v350 = vmul.f32 %v335, %v335
    %v351 = vmul.f32 %v295, %v295
    %v352 = vmul.f32 %v309, %v309
    %v353 = vmul.f32 %v323, %v323
    %v354 = vmul.f32 %v337, %v337
    %v355 = vmul.f32 %v347, %v293
    %v356 = vmul.f32 %v348, %v307
    %v357 = vmul.f32 %v349, %v321
    %v358 = vmul.f32 %v350, %v335
    %v359 = vmul.f32 %v351, %v295
    %v360 = vmul.f32 %v352, %v309
    %v361 = vmul.f32 %v353, %v323
    %v362 = vmul.f32 %v354, %v337
    %v363 = vmul.f32 %v355, 0.044715
    %v364 = vmul.f32 %v356, 0.044715
    %v365 = vmul.f32 %v357, 0.044715
    %v366 = vmul.f32 %v358, 0.044715
    %v367 = vmul.f32 %v359, 0.044715
    %v368 = vmul.f32 %v360, 0.044715
    %v369 = vmul.f32 %v361, 0.044715
    %v370 = vmul.f32 %v362, 0.044715
    %v371 = vadd.f32 %v293, %v363
    %v372 = vadd.f32 %v307, %v364
    %v373 = vadd.f32 %v321, %v365
    %v374 = vadd.f32 %v335, %v366
    %v375 = vadd.f32 %v295, %v367
    %v376 = vadd.f32 %v309, %v368
    %v377 = vadd.f32 %v323, %v369
    %v378 = vadd.f32 %v337, %v370
    %v379 = vmul.f32 %v371, 0.7978846
    %v380 = vmul.f32 %v372, 0.7978846
    %v381 = vmul.f32 %v373, 0.7978846
    %v382 = vmul.f32 %v374, 0.7978846
    %v383 = vmul.f32 %v375, 0.7978846
    %v384 = vmul.f32 %v376, 0.7978846
    %v385 = vmul.f32 %v377, 0.7978846
    %v386 = vmul.f32 %v378, 0.7978846
    %v387 = vtanh.pop %v379
    %v388 = vtanh.pop %v380
    %v389 = vtanh.pop %v381
    %v390 = vtanh.pop %v382
    %v391 = vtanh.pop %v383
    %v392 = vtanh.pop %v384
    %v393 = vtanh.pop %v385
    %v394 = vtanh.pop %v386
    %v395 = vadd.f32 %v387, 1.0
    %v396 = vadd.f32 %v388, 1.0
    %v397 = vadd.f32 %v389, 1.0
    %v398 = vadd.f32 %v390, 1.0
    %v399 = vadd.f32 %v391, 1.0
    %v400 = vadd.f32 %v392, 1.0
    %v401 = vadd.f32 %v393, 1.0
    %v402 = vadd.f32 %v394, 1.0
    %v403 = vmul.f32 %v339, %v395
    %v404 = vmul.f32 %v340, %v396
    %v405 = vmul.f32 %v341, %v397
    %v406 = vmul.f32 %v342, %v398
    %v407 = vmul.f32 %v343, %v399
    %v408 = vmul.f32 %v344, %v400
    %v409 = vmul.f32 %v345, %v401
    %v410 = vmul.f32 %v346, %v402
    %v411 = vpack.c.bf16 %v407, %v403
    %v412 = vpack.c.bf16 %v408, %v404
    %v413 = vpack.c.bf16 %v409, %v405
    %v414 = vpack.c.bf16 %v410, %v406
    %v415 = vld [vmem:[#allocation7] sm:$0xf]
    %v416 = vld [vmem:[#allocation7 + $0x4] sm:$0xf]
    %v417 = vld [vmem:[#allocation7 + $0x8] sm:$0xf]
    %v418 = vld [vmem:[#allocation7 + $0xc] sm:$0xf]
    %v419 = vld [vmem:[#allocation7 + $0x10] sm:$0xf]
    %v420 = vld [vmem:[#allocation7 + $0x14] sm:$0xf]
    %v421 = vld [vmem:[#allocation7 + $0x18] sm:$0xf]
    %v422 = vld [vmem:[#allocation7 + $0x1c] sm:$0xf]
    %v423 = vld [vmem:[#allocation7 + $0x20] sm:$0xf]
    %v424 = vld [vmem:[#allocation7 + $0x24] sm:$0xf]
    %v425 = vld [vmem:[#allocation7 + $0x28] sm:$0xf]
    %v426 = vld [vmem:[#allocation7 + $0x2c] sm:$0xf]
    %v427 = vld [vmem:[#allocation7 + $0x30] sm:$0xf]
    %v428 = vld [vmem:[#allocation7 + $0x34] sm:$0xf]
    %v429 = vld [vmem:[#allocation7 + $0x38] sm:$0xf]
    %v430 = vld [vmem:[#allocation7 + $0x3c] sm:$0xf]
    %v431 = vld [vmem:[#allocation7 + $0x40] sm:$0xf]
    %v432 = vld [vmem:[#allocation7 + $0x44] sm:$0xf]
    %v433 = vld [vmem:[#allocation7 + $0x48] sm:$0xf]
    %v434 = vld [vmem:[#allocation7 + $0x4c] sm:$0xf]
    %v435 = vld [vmem:[#allocation7 + $0x50] sm:$0xf]
    %v436 = vld [vmem:[#allocation7 + $0x54] sm:$0xf]
    %v437 = vld [vmem:[#allocation7 + $0x58] sm:$0xf]
    %v438 = vld [vmem:[#allocation7 + $0x5c] sm:$0xf]
    %v439 = vld [vmem:[#allocation7 + $0x60] sm:$0xf]
    %v440 = vld [vmem:[#allocation7 + $0x64] sm:$0xf]
    %v441 = vld [vmem:[#allocation7 + $0x68] sm:$0xf]
    %v442 = vld [vmem:[#allocation7 + $0x6c] sm:$0xf]
    %v443 = vld [vmem:[#allocation7 + $0x70] sm:$0xf]
    %v444 = vld [vmem:[#allocation7 + $0x74] sm:$0xf]
    %v445 = vld [vmem:[#allocation7 + $0x78] sm:$0xf]
    %v446 = vld [vmem:[#allocation7 + $0x7c] sm:$0xf]
    %v447 = vld [vmem:[#allocation7 + $0x80] sm:$0xf]
    %v448 = vld [vmem:[#allocation7 + $0x84] sm:$0xf]
    %v449 = vld [vmem:[#allocation7 + $0x88] sm:$0xf]
    %v450 = vld [vmem:[#allocation7 + $0x8c] sm:$0xf]
    %v451 = vld [vmem:[#allocation7 + $0x90] sm:$0xf]
    %v452 = vld [vmem:[#allocation7 + $0x94] sm:$0xf]
    %v453 = vld [vmem:[#allocation7 + $0x98] sm:$0xf]
    %v454 = vld [vmem:[#allocation7 + $0x9c] sm:$0xf]
    %v455 = vld [vmem:[#allocation7 + $0xa0] sm:$0xf]
    %v456 = vld [vmem:[#allocation7 + $0xa4] sm:$0xf]
    %v457 = vld [vmem:[#allocation7 + $0xa8] sm:$0xf]
    %v458 = vld [vmem:[#allocation7 + $0xac] sm:$0xf]
    %v459 = vld [vmem:[#allocation7 + $0xb0] sm:$0xf]
    %v460 = vld [vmem:[#allocation7 + $0xb4] sm:$0xf]
    %v461 = vld [vmem:[#allocation7 + $0xb8] sm:$0xf]
    %v462 = vld [vmem:[#allocation7 + $0xbc] sm:$0xf]
    %v463 = vld [vmem:[#allocation7 + $0xc0] sm:$0xf]
    %v464 = vld [vmem:[#allocation7 + $0xc4] sm:$0xf]
    %v465 = vld [vmem:[#allocation7 + $0xc8] sm:$0xf]
    %v466 = vld [vmem:[#allocation7 + $0xcc] sm:$0xf]
    %v467 = vld [vmem:[#allocation7 + $0xd0] sm:$0xf]
    %v468 = vld [vmem:[#allocation7 + $0xd4] sm:$0xf]
    %v469 = vld [vmem:[#allocation7 + $0xd8] sm:$0xf]
    %v470 = vld [vmem:[#allocation7 + $0xdc] sm:$0xf]
    %v471 = vld [vmem:[#allocation7 + $0xe0] sm:$0xf]
    %v472 = vld [vmem:[#allocation7 + $0xe4] sm:$0xf]
    %v473 = vld [vmem:[#allocation7 + $0xe8] sm:$0xf]
    %v474 = vld [vmem:[#allocation7 + $0xec] sm:$0xf]
    %v475 = vld [vmem:[#allocation7 + $0xf0] sm:$0xf]
    %v476 = vld [vmem:[#allocation7 + $0xf4] sm:$0xf]
    %v477 = vld [vmem:[#allocation7 + $0xf8] sm:$0xf]
    %v478 = vld [vmem:[#allocation7 + $0xfc] sm:$0xf]
    %v479 = vld [vmem:[%s4] sm:$0x1]
    %v480 = vunpack.c.l.bf16 %v479
    %v481 = vperm.slane %v480, 0
    %v546 = vunpack.c.l.b16 %v415
    %v547 = vunpack.c.l.b16 %v416
    %v548 = vunpack.c.l.b16 %v417
    %v549 = vunpack.c.l.b16 %v418
    %v550 = vunpack.c.l.b16 %v419
    %v551 = vunpack.c.l.b16 %v420
    %v552 = vunpack.c.l.b16 %v421
    %v553 = vunpack.c.l.b16 %v422
    %v554 = vunpack.c.l.b16 %v423
    %v555 = vunpack.c.l.b16 %v424
    %v556 = vunpack.c.l.b16 %v425
    %v557 = vunpack.c.l.b16 %v426
    %v558 = vunpack.c.l.b16 %v427
    %v559 = vunpack.c.l.b16 %v428
    %v560 = vunpack.c.l.b16 %v429
    %v561 = vunpack.c.l.b16 %v430
    %v562 = vunpack.c.l.b16 %v431
    %v563 = vunpack.c.l.b16 %v432
    %v564 = vunpack.c.l.b16 %v433
    %v565 = vunpack.c.l.b16 %v434
    %v566 = vunpack.c.l.b16 %v435
    %v567 = vunpack.c.l.b16 %v436
    %v568 = vunpack.c.l.b16 %v437
    %v569 = vunpack.c.l.b16 %v438
    %v570 = vunpack.c.l.b16 %v439
    %v571 = vunpack.c.l.b16 %v440
    %v572 = vunpack.c.l.b16 %v441
    %v573 = vunpack.c.l.b16 %v442
    %v574 = vunpack.c.l.b16 %v443
    %v575 = vunpack.c.l.b16 %v444
    %v576 = vunpack.c.l.b16 %v445
    %v577 = vunpack.c.l.b16 %v446
    %v578 = vunpack.c.l.b16 %v447
    %v579 = vunpack.c.l.b16 %v448
    %v580 = vunpack.c.l.b16 %v449
    %v581 = vunpack.c.l.b16 %v450
    %v582 = vunpack.c.l.b16 %v451
    %v583 = vunpack.c.l.b16 %v452
    %v584 = vunpack.c.l.b16 %v453
    %v585 = vunpack.c.l.b16 %v454
    %v586 = vunpack.c.l.b16 %v455
    %v587 = vunpack.c.l.b16 %v456
    %v588 = vunpack.c.l.b16 %v457
    %v589 = vunpack.c.l.b16 %v458
    %v590 = vunpack.c.l.b16 %v459
    %v591 = vunpack.c.l.b16 %v460
    %v592 = vunpack.c.l.b16 %v461
    %v593 = vunpack.c.l.b16 %v462
    %v594 = vunpack.c.l.b16 %v463
    %v595 = vunpack.c.l.b16 %v464
    %v596 = vunpack.c.l.b16 %v465
    %v597 = vunpack.c.l.b16 %v466
    %v598 = vunpack.c.l.b16 %v467
    %v599 = vunpack.c.l.b16 %v468
    %v600 = vunpack.c.l.b16 %v469
    %v601 = vunpack.c.l.b16 %v470
    %v602 = vunpack.c.l.b16 %v471
    %v603 = vunpack.c.l.b16 %v472
    %v604 = vunpack.c.l.b16 %v473
    %v605 = vunpack.c.l.b16 %v474
    %v606 = vunpack.c.l.b16 %v475
    %v607 = vunpack.c.l.b16 %v476
    %v608 = vunpack.c.l.b16 %v477
    %v609 = vunpack.c.l.b16 %v478
    %v610 = vpack.c.b16 %v547, %v546
    %v611 = vpack.c.b16 %v549, %v548
    %v612 = vpack.c.b16 %v551, %v550
    %v613 = vpack.c.b16 %v553, %v552
    %v614 = vpack.c.b16 %v555, %v554
    %v615 = vpack.c.b16 %v557, %v556
    %v616 = vpack.c.b16 %v559, %v558
    %v617 = vpack.c.b16 %v561, %v560
    %v618 = vpack.c.b16 %v563, %v562
    %v619 = vpack.c.b16 %v565, %v564
    %v620 = vpack.c.b16 %v567, %v566
    %v621 = vpack.c.b16 %v569, %v568
    %v622 = vpack.c.b16 %v571, %v570
    %v623 = vpack.c.b16 %v573, %v572
    %v624 = vpack.c.b16 %v575, %v574
    %v625 = vpack.c.b16 %v577, %v576
    %v626 = vpack.c.b16 %v579, %v578
    %v627 = vpack.c.b16 %v581, %v580
    %v628 = vpack.c.b16 %v583, %v582
    %v629 = vpack.c.b16 %v585, %v584
    %v630 = vpack.c.b16 %v587, %v586
    %v631 = vpack.c.b16 %v589, %v588
    %v632 = vpack.c.b16 %v591, %v590
    %v633 = vpack.c.b16 %v593, %v592
    %v634 = vpack.c.b16 %v595, %v594
    %v635 = vpack.c.b16 %v597, %v596
    %v636 = vpack.c.b16 %v599, %v598
    %v637 = vpack.c.b16 %v601, %v600
    %v638 = vpack.c.b16 %v603, %v602
    %v639 = vpack.c.b16 %v605, %v604
    %v640 = vpack.c.b16 %v607, %v606
    %v641 = vpack.c.b16 %v609, %v608
    %674 = vmatpush.bf16.msra.mxu0 %v617
    %675 = vmatpush.bf16.msra.mxu0 %v616
    %676 = vmatpush.bf16.msra.mxu0 %v615
    %677 = vmatpush.bf16.msra.mxu0 %v614
    %678 = vmatpush.bf16.msra.mxu0 %v613
    %679 = vmatpush.bf16.msra.mxu0 %v612
    %680 = vmatpush.bf16.msra.mxu0 %v611
    %681 = vmatpush.bf16.msra.mxu0 %v610
    %682 = vmatmul.bf16.gmra.mxu0 %v411
    %v683 = vpop.f32.mrf.mxu0
    %v684 = vadd.f32 %v481, %v683
    %v685 = vpop.f32.mrf.mxu0
    %v686 = vadd.f32 %v481, %v685
    %687 = vdwg.mxu0
    %688 = vmatpush.bf16.msra.mxu0 %v625
    %689 = vmatpush.bf16.msra.mxu0 %v624
    %690 = vmatpush.bf16.msra.mxu0 %v623
    %691 = vmatpush.bf16.msra.mxu0 %v622
    %692 = vmatpush.bf16.msra.mxu0 %v621
    %693 = vmatpush.bf16.msra.mxu0 %v620
    %694 = vmatpush.bf16.msra.mxu0 %v619
    %695 = vmatpush.bf16.msra.mxu0 %v618
    %696 = vmatmul.bf16.gmra.mxu0 %v412
    %v697 = vpop.f32.mrf.mxu0
    %v698 = vadd.f32 %v684, %v697
    %v699 = vpop.f32.mrf.mxu0
    %v700 = vadd.f32 %v686, %v699
    %701 = vdwg.mxu0
    %702 = vmatpush.bf16.msra.mxu0 %v633
    %703 = vmatpush.bf16.msra.mxu0 %v632
    %704 = vmatpush.bf16.msra.mxu0 %v631
    %705 = vmatpush.bf16.msra.mxu0 %v630
    %706 = vmatpush.bf16.msra.mxu0 %v629
    %707 = vmatpush.bf16.msra.mxu0 %v628
    %708 = vmatpush.bf16.msra.mxu0 %v627
    %709 = vmatpush.bf16.msra.mxu0 %v626
    %710 = vmatmul.bf16.gmra.mxu0 %v413
    %v711 = vpop.f32.mrf.mxu0
    %v712 = vadd.f32 %v698, %v711
    %v713 = vpop.f32.mrf.mxu0
    %v714 = vadd.f32 %v700, %v713
    %715 = vdwg.mxu0
    %716 = vmatpush.bf16.msra.mxu0 %v641
    %717 = vmatpush.bf16.msra.mxu0 %v640
    %718 = vmatpush.bf16.msra.mxu0 %v639
    %719 = vmatpush.bf16.msra.mxu0 %v638
    %720 = vmatpush.bf16.msra.mxu0 %v637
    %721 = vmatpush.bf16.msra.mxu0 %v636
    %722 = vmatpush.bf16.msra.mxu0 %v635
    %723 = vmatpush.bf16.msra.mxu0 %v634
    %724 = vmatmul.bf16.gmra.mxu0 %v414
    %v725 = vpop.f32.mrf.mxu0
    %v726 = vadd.f32 %v712, %v725
    %v727 = vpop.f32.mrf.mxu0
    %v728 = vadd.f32 %v714, %v727
    %729 = vdwg.mxu0
    %v730 = vpack.c.bf16 %v726, %v726
    %v731 = vpack.c.bf16 %v728, %v728
    %732 = vst [vmem:[#allocation8] sm:$0xf] %v730
    %733 = vst [vmem:[#allocation8 + $0x4] sm:$0xf] %v731
    // Predicated region
    $region34: #{mlp_pallas.1} parent=1 // pred_check
      _
    $region35: #{mlp_pallas.1} parent=1 // pred_check_branch
      %735 = sbr.rel (0) target = $region37
    $region36: #{mlp_pallas.1} parent=1 // pred_region
      %737 = vsyncadd [#allocation4], 0
      %s738 = sshll.u32 [#allocation8], 4
      %s739 = int_to_ptr.vmem [resolvable:$true] %s738
      %s740 = sshll.u32 %s5, 4
      %s741 = int_to_ptr.hbm [resolvable:$true] %s740
      %746 = dma.vmem_to_hbm [thread:$0]  %s739, 128, %s741, [#allocation4], 64, 64, 4
    $region37: #{mlp_pallas.1} parent=1 // pred_fallthru
      _
    // Predicated region
    $region38: #{mlp_pallas.1} parent=1 // pred_check
      _
    $region39: #{mlp_pallas.1} parent=1 // pred_check_branch
      %748 = sbr.rel (0) target = $region41
    $region40: #{mlp_pallas.1} parent=1 // pred_region
      %750 = dma.done [#allocation4], 128
    $region41: #{mlp_pallas.1} parent=1 // pred_fallthru
      _
    %751 = vsyncpa [#allocation3], 1
    %752 = vsyncpa [#allocation6], 1
    %753 = vsyncpa [#allocation4], 1

</llo_original>
